<compile_context>
chip_gen: v7x
topology: tpu7x:2x2x1
jax: 0.10.0
libtpu: 0.0.40
codegen_flags: <defaults>
</compile_context>

<pallas_src>
import functools

import jax
import jax.numpy as jnp
from jax.experimental import pallas as pl
from jax.experimental.pallas import tpu as pltpu


def _loss_kernel(pred_ref, obs_ref, media_ref, num_ref, den_ref,
                 *, batch_size, tile_b, mask_rows):
    bi = pl.program_id(1)  # batch-tile (reduction) axis — last grid axis

    @pl.when(bi == 0)
    def _():
        num_ref[...] = jnp.zeros_like(num_ref)
        den_ref[...] = jnp.zeros_like(den_ref)

    pred = pred_ref[...].astype(jnp.float32)    # (tb, tt)
    obs = obs_ref[...].astype(jnp.float32)      # (tb, tt)
    media = media_ref[...].astype(jnp.float32)  # (1, tt), broadcast over rows

    d = pred - obs
    sq = d * d                                  # |diff|**2 == diff**2 (real)
    dev = obs - media
    dsq = dev * dev

    if mask_rows:
        # Mask padded rows of the (possibly partial) last batch tile.
        rows = bi * tile_b + jax.lax.broadcasted_iota(jnp.int32, sq.shape, 0)
        valid = rows < batch_size
        sq = jnp.where(valid, sq, 0.0)
        dsq = jnp.where(valid, dsq, 0.0)

    num_ref[...] += jnp.sum(sq, axis=0, keepdims=True)   # (1, tt)
    den_ref[...] += jnp.sum(dsq, axis=0, keepdims=True)  # (1, tt)


def custom_loss2(y_pred: jax.Array, y_obs: jax.Array, media: jax.Array,
                 *, tile_b: int = 512, tile_t: int = 1024):
    """Returns (mse, nse, rmse). `mse` is what CustomLoss2.forward returns."""
    B, T = y_pred.shape
    media2d = media.reshape(1, T)  # native dtype; cast happens in-kernel

    # Block sizes: either the full dim (always legal) or a (8,128)-aligned tile.
    tb = B if B <= tile_b else max(8, (tile_b // 8) * 8)
    tt = T if T <= tile_t else max(128, (tile_t // 128) * 128)
    grid = (pl.cdiv(T, tt), pl.cdiv(B, tb))  # (parallel T-tiles, reduction B-tiles)

    kernel = functools.partial(
        _loss_kernel,
        batch_size=B,
        tile_b=tb,
        mask_rows=(B % tb != 0),
    )

    itemsize_p = jnp.dtype(y_pred.dtype).itemsize
    itemsize_o = jnp.dtype(y_obs.dtype).itemsize
    cost = pl.CostEstimate(
        flops=5 * B * T,
        transcendentals=0,
        bytes_accessed=(B * T * itemsize_p + B * T * itemsize_o
                        + T * jnp.dtype(media2d.dtype).itemsize + 2 * T * 4),
    )

    num, den = pl.pallas_call(
        kernel,
        out_shape=(
            jax.ShapeDtypeStruct((1, T), jnp.float32),
            jax.ShapeDtypeStruct((1, T), jnp.float32),
        ),
        grid_spec=pltpu.PrefetchScalarGridSpec(
            num_scalar_prefetch=0,
            grid=grid,
            in_specs=[
                pl.BlockSpec((tb, tt), lambda tj, bi: (bi, tj)),   # y_pred
                pl.BlockSpec((tb, tt), lambda tj, bi: (bi, tj)),   # y_obs
                pl.BlockSpec((1, tt), lambda tj, bi: (0, tj)),     # media (const over bi)
            ],
            out_specs=[
                pl.BlockSpec((1, tt), lambda tj, bi: (0, tj)),     # num accumulator
                pl.BlockSpec((1, tt), lambda tj, bi: (0, tj)),     # den accumulator
            ],
        ),
        compiler_params=pltpu.CompilerParams(
            dimension_semantics=("parallel", "arbitrary"),
            vmem_limit_bytes=48 * 1024 * 1024,
        ),
        cost_estimate=cost,
    )(y_pred, y_obs, media2d)

    # Tiny scalar epilogue in the wrapper (keeps kernel stores lane-dense).
    # The +1e-8 epsilon is added exactly once, after the full column sums.
    mse = jnp.sum(num) / (B * T)
    # TODO(synk): torch.nanmean skips NaNs; inputs here are finite so plain mean matches.
    nse = jnp.mean(1.0 - num / (den + 1e-8))
    rmse = jnp.sqrt(mse)
    return mse, nse, rmse


def _reference(y_pred, y_obs, media):
    ref_mse = jnp.mean(jnp.abs(y_pred - y_obs) ** 2)
    ref_num = jnp.sum((y_pred - y_obs) ** 2, axis=0)
    ref_den = jnp.sum((y_obs - media[None, :]) ** 2, axis=0) + 1e-8
    ref_nse = jnp.mean(1.0 - ref_num / ref_den)
    return ref_mse, ref_nse, jnp.sqrt(ref_mse)


if __name__ == "__main__":
    key = jax.random.PRNGKey(0)
    k1, k2, k3, k4, k5 = jax.random.split(key, 5)

    # Case 1: small lane-aligned (batch, horizon) — single tile, full-dim blocks.
    B, T = 8, 128
    y_pred = jax.random.normal(k1, (B, T), dtype=jnp.float32)
    y_obs = jax.random.normal(k2, (B, T), dtype=jnp.float32)
    media = jax.random.normal(k3, (T,), dtype=jnp.float32) * 0.1

    mse, nse, rmse = custom_loss2(y_pred, y_obs, media)
    jax.block_until_ready((mse, nse, rmse))

    ref_mse, ref_nse, ref_rmse = _reference(y_pred, y_obs, media)
    assert jnp.allclose(mse, ref_mse, rtol=1e-5, atol=1e-6), (mse, ref_mse)
    assert jnp.allclose(nse, ref_nse, rtol=1e-5, atol=1e-6), (nse, ref_nse)
    assert jnp.allclose(rmse, ref_rmse, rtol=1e-5, atol=1e-6), (rmse, ref_rmse)

    # Case 2: batch not a multiple of the batch tile — exercises the masked
    # remainder-tile + multi-step accumulation path (tile_b forced small).
    B2, T2 = 20, 128
    y_pred2 = jax.random.normal(k4, (B2, T2), dtype=jnp.float32)
    y_obs2 = jax.random.normal(k5, (B2, T2), dtype=jnp.float32)
    media2 = jnp.mean(y_obs2, axis=0)

    mse2, nse2, rmse2 = custom_loss2(y_pred2, y_obs2, media2, tile_b=8)
    jax.block_until_ready((mse2, nse2, rmse2))

    ref_mse2, ref_nse2, ref_rmse2 = _reference(y_pred2, y_obs2, media2)
    assert jnp.allclose(mse2, ref_mse2, rtol=1e-5, atol=1e-6), (mse2, ref_mse2)
    assert jnp.allclose(nse2, ref_nse2, rtol=1e-5, atol=1e-6), (nse2, ref_nse2)
    assert jnp.allclose(rmse2, ref_rmse2, rtol=1e-5, atol=1e-6), (rmse2, ref_rmse2)

    print("KERNEL_OK")
</pallas_src>

<mosaic_0001>
module attributes {stable_mosaic.version = 11 : i64} {
  func.func @_loss_kernel(%arg0: i32, %arg1: i32, %arg2: memref<8x128xf32, #tpu.memory_space<vmem>>, %arg3: memref<8x128xf32, #tpu.memory_space<vmem>>, %arg4: memref<1x128xf32, #tpu.memory_space<vmem>>, %arg5: memref<1x128xf32, #tpu.memory_space<vmem>>, %arg6: memref<1x128xf32, #tpu.memory_space<vmem>>) attributes {dimension_semantics = [#tpu.dimension_semantics<parallel>, #tpu.dimension_semantics<arbitrary>], iteration_bounds = array<i64: 1, 1>, scalar_prefetch = 0 : i64, scratch_operands = 0 : i64, tpu.core_type = #tpu.core_type<tc>, window_params = [{transform_indices = @transform_0, window_bounds = array<i64: 8, 128>}, {transform_indices = @transform_1, window_bounds = array<i64: 8, 128>}, {transform_indices = @transform_2, window_bounds = array<i64: 1, 128>}, {transform_indices = @transform_3, window_bounds = array<i64: 1, 128>}, {transform_indices = @transform_4, window_bounds = array<i64: 1, 128>}]} {
    %c0_i32 = arith.constant 0 : i32
    %0 = arith.cmpi eq, %arg1, %c0_i32 : i32
    %1 = arith.extui %0 : i1 to i32
    %c0_i32_0 = arith.constant 0 : i32
    %2 = arith.cmpi ne, %1, %c0_i32_0 : i32
    scf.if %2 {
      %cst_15 = arith.constant 0.000000e+00 : f32
      %21 = vector.broadcast %cst_15 : f32 to vector<1x128xf32>
      %c0_16 = arith.constant 0 : index
      %c0_17 = arith.constant 0 : index
      %22 = vector.load %arg5[%c0_16, %c0_17] : memref<1x128xf32, #tpu.memory_space<vmem>>, vector<1x128xf32>
      tpu.vector_store %arg5[%c0_16, %c0_17], %21 {strides = array<i32>} : memref<1x128xf32, #tpu.memory_space<vmem>>, vector<1x128xf32>,
      %cst_18 = arith.constant 0.000000e+00 : f32
      %23 = vector.broadcast %cst_18 : f32 to vector<1x128xf32>
      %c0_19 = arith.constant 0 : index
      %c0_20 = arith.constant 0 : index
      %24 = vector.load %arg6[%c0_19, %c0_20] : memref<1x128xf32, #tpu.memory_space<vmem>>, vector<1x128xf32>
      tpu.vector_store %arg6[%c0_19, %c0_20], %23 {strides = array<i32>} : memref<1x128xf32, #tpu.memory_space<vmem>>, vector<1x128xf32>,
    } else {
    }
    %c0 = arith.constant 0 : index
    %c0_1 = arith.constant 0 : index
    %3 = vector.load %arg2[%c0, %c0_1] : memref<8x128xf32, #tpu.memory_space<vmem>>, vector<8x128xf32>
    %c0_2 = arith.constant 0 : index
    %c0_3 = arith.constant 0 : index
    %4 = vector.load %arg3[%c0_2, %c0_3] : memref<8x128xf32, #tpu.memory_space<vmem>>, vector<8x128xf32>
    %c0_4 = arith.constant 0 : index
    %c0_5 = arith.constant 0 : index
    %5 = vector.load %arg4[%c0_4, %c0_5] : memref<1x128xf32, #tpu.memory_space<vmem>>, vector<1x128xf32>
    %6 = arith.subf %3, %4 : vector<8x128xf32>
    %7 = arith.mulf %6, %6 : vector<8x128xf32>
    %8 = vector.broadcast %5 : vector<1x128xf32> to vector<8x128xf32>
    %9 = arith.subf %4, %8 : vector<8x128xf32>
    %10 = arith.mulf %9, %9 : vector<8x128xf32>
    %c0_6 = arith.constant 0 : index
    %c0_7 = arith.constant 0 : index
    %11 = vector.load %arg5[%c0_6, %c0_7] : memref<1x128xf32, #tpu.memory_space<vmem>>, vector<1x128xf32>
    %cst = arith.constant dense<0.000000e+00> : vector<128xf32>
    %12 = vector.multi_reduction <add>, %7, %cst [0] : vector<8x128xf32> to vector<128xf32>
    %13 = vector.shape_cast %12 : vector<128xf32> to vector<1x128xf32>
    %14 = arith.addf %11, %13 : vector<1x128xf32>
    %c0_8 = arith.constant 0 : index
    %c0_9 = arith.constant 0 : index
    %15 = vector.load %arg5[%c0_8, %c0_9] : memref<1x128xf32, #tpu.memory_space<vmem>>, vector<1x128xf32>
    tpu.vector_store %arg5[%c0_8, %c0_9], %14 {strides = array<i32>} : memref<1x128xf32, #tpu.memory_space<vmem>>, vector<1x128xf32>,
    %c0_10 = arith.constant 0 : index
    %c0_11 = arith.constant 0 : index
    %16 = vector.load %arg6[%c0_10, %c0_11] : memref<1x128xf32, #tpu.memory_space<vmem>>, vector<1x128xf32>
    %cst_12 = arith.constant dense<0.000000e+00> : vector<128xf32>
    %17 = vector.multi_reduction <add>, %10, %cst_12 [0] : vector<8x128xf32> to vector<128xf32>
    %18 = vector.shape_cast %17 : vector<128xf32> to vector<1x128xf32>
    %19 = arith.addf %16, %18 : vector<1x128xf32>
    %c0_13 = arith.constant 0 : index
    %c0_14 = arith.constant 0 : index
    %20 = vector.load %arg6[%c0_13, %c0_14] : memref<1x128xf32, #tpu.memory_space<vmem>>, vector<1x128xf32>
    tpu.vector_store %arg6[%c0_13, %c0_14], %19 {strides = array<i32>} : memref<1x128xf32, #tpu.memory_space<vmem>>, vector<1x128xf32>,
    return
  }
  func.func @transform_0(%arg0: i32, %arg1: i32) -> (i32, i32) {
    %c0_i32 = arith.constant 0 : i32
    return %arg1, %arg0 : i32, i32
  }
  func.func @transform_1(%arg0: i32, %arg1: i32) -> (i32, i32) {
    %c0_i32 = arith.constant 0 : i32
    return %arg1, %arg0 : i32, i32
  }
  func.func @transform_2(%arg0: i32, %arg1: i32) -> (i32, i32) {
    %c0_i32 = arith.constant 0 : i32
    %c0_i32_0 = arith.constant 0 : i32
    return %c0_i32, %arg0 : i32, i32
  }
  func.func @transform_3(%arg0: i32, %arg1: i32) -> (i32, i32) {
    %c0_i32 = arith.constant 0 : i32
    %c0_i32_0 = arith.constant 0 : i32
    return %c0_i32, %arg0 : i32, i32
  }
  func.func @transform_4(%arg0: i32, %arg1: i32) -> (i32, i32) {
    %c0_i32 = arith.constant 0 : i32
    %c0_i32_0 = arith.constant 0 : i32
    return %c0_i32, %arg0 : i32, i32
  }
}

</mosaic_0001>

<llo_original>
// kernel: tpu_custom_call.1
$region0: #{tpu_custom_call.1}
  #allocation0 [shape = 'u32[]', space=smem, size = 0x4, offset = 0x4, fixed_abs, tag = 'smem constant byte address 0x4 - core index']
  #allocation1 [shape = 'u32[144,128]{1,0:T(1,128)}', space=vmem, size = 0x12000, scoped, tag = 'internal scratch']
  %s0 = inlined_call_operand.hbm [shape: f32[8,128], index: 0, kind: input, shape index: {}]
  %s1 = inlined_call_operand.hbm [shape: f32[8,128], index: 1, kind: input, shape index: {}]
  %s2 = inlined_call_operand.vmem [shape: f32[1,128], index: 2, kind: input, shape index: {}]
  %s3 = inlined_call_operand.hbm [shape: f32[1,128], index: 3, kind: output, shape index: {0}]
  %s4 = inlined_call_operand.hbm [shape: f32[1,128], index: 4, kind: output, shape index: {1}]
  %5 = xla_tuple %s3, %s4
  %s6 = sld [smem:[#allocation0]]
  $region42: #{tpu_custom_call.1} parent=0
    _
  %s8 = ssub.s32 1, %s6
  %s9 = scalar_select 0, %s8, %s6
  $region1: #{tpu_custom_call.1} parent=0
    #allocation2 [shape = 'u8[4096]{0}', space=vmem, size = 0x1000, scoped, tag = 'input window, operand 0, single buffered']
    #allocation3 [shape = 's32[1]{0}', space=sflag, size = 0x4, scoped, tag = 'scoped memory for tpu_custom_call.1']
    #allocation4 [shape = 's32[1]{0}', space=sflag, size = 0x4, scoped, tag = 'scoped memory for tpu_custom_call.1']
    #allocation5 [shape = 'u8[4096]{0}', space=vmem, size = 0x1000, scoped, tag = 'input window, operand 1, single buffered']
    #allocation6 [shape = 's32[1]{0}', space=sflag, size = 0x4, scoped, tag = 'scoped memory for tpu_custom_call.1']
    #allocation7 [shape = 'u8[512]{0}', space=vmem, size = 0x400, scoped, tag = 'output window, operand 0, single buffered']
    #allocation8 [shape = 'u8[512]{0}', space=vmem, size = 0x400, scoped, tag = 'output window, operand 1, single buffered']
    #allocation9 [shape = 's32[1]{0}', space=sflag, size = 0x4, scoped, tag = 'scoped memory for tpu_custom_call.1']
    %10 = vsyncpa [#allocation3], 0
    %11 = vsyncpa [#allocation6], 0
    %12 = vsyncpa [#allocation4], 0
    %13 = vsyncpa [#allocation9], 0
    // Predicated region
    $region2: #{tpu_custom_call.1} parent=1 // pred_check
      _
    $region3: #{tpu_custom_call.1} parent=1 // pred_check_branch
      %15 = sbr.rel (0) target = $region5
    $region4: #{tpu_custom_call.1} parent=1 // pred_region
      %s17 = ssub.s32 128, 128
      %18 = vsyncadd [#allocation3], %s17
      %s20 = sshll.u32 [#allocation2], 4
      %s21 = int_to_ptr.vmem [resolvable:$true] %s20
      %23 = dma.hbm_to_vmem [thread:$0]  %s0, 128, %s21, [#allocation3]
    $region5: #{tpu_custom_call.1} parent=1 // pred_fallthru
      _
    // Predicated region
    $region6: #{tpu_custom_call.1} parent=1 // pred_check
      _
    $region7: #{tpu_custom_call.1} parent=1 // pred_check_branch
      %25 = sbr.rel (0) target = $region9
    $region8: #{tpu_custom_call.1} parent=1 // pred_region
      %s27 = ssub.s32 128, 128
      %28 = vsyncadd [#allocation6], %s27
      %s30 = sshll.u32 [#allocation5], 4
      %s31 = int_to_ptr.vmem [resolvable:$true] %s30
      %33 = dma.hbm_to_vmem [thread:$0]  %s1, 128, %s31, [#allocation6]
    $region9: #{tpu_custom_call.1} parent=1 // pred_fallthru
      _
    // Predicated region
    $region10: #{tpu_custom_call.1} parent=1 // pred_check
      _
    $region11: #{tpu_custom_call.1} parent=1 // pred_check_branch
      %35 = sbr.rel (0) target = $region13
    $region12: #{tpu_custom_call.1} parent=1 // pred_region
      _
    $region13: #{tpu_custom_call.1} parent=1 // pred_fallthru
      _
    // Predicated region
    $region14: #{tpu_custom_call.1} parent=1 // pred_check
      _
    $region15: #{tpu_custom_call.1} parent=1 // pred_check_branch
      %37 = sbr.rel (0) target = $region17
    $region16: #{tpu_custom_call.1} parent=1 // pred_region
      %38 = dma.done [#allocation3], 128
    $region17: #{tpu_custom_call.1} parent=1 // pred_fallthru
      _
    // Predicated region
    $region18: #{tpu_custom_call.1} parent=1 // pred_check
      _
    $region19: #{tpu_custom_call.1} parent=1 // pred_check_branch
      %40 = sbr.rel (0) target = $region21
    $region20: #{tpu_custom_call.1} parent=1 // pred_region
      %41 = dma.done [#allocation6], 128
    $region21: #{tpu_custom_call.1} parent=1 // pred_fallthru
      _
    %p42 = scmp.eq.s32.totalorder 0, 0
    // Predicated region
    $region22: #{tpu_custom_call.1} parent=1 // pred_check
      %p43 = pneg %p42
    $region23: #{tpu_custom_call.1} parent=1 // pred_check_branch
      %45 = sbr.rel (%p43) target = $region25
    $region24: #{tpu_custom_call.1} parent=1 // pred_region
      %46 = vst [vmem:[#allocation7] sm:$0x1] 0.0
      %47 = vst [vmem:[#allocation8] sm:$0x1] 0.0
    $region25: #{tpu_custom_call.1} parent=1 // pred_fallthru
      _
    %v48 = vld [vmem:[#allocation2] sm:$0xff]
    %v49 = vld [vmem:[#allocation5] sm:$0xff]
    %v50 = vld [vmem:[%s2] sm:$0x1]
    %v51 = vsub.f32 %v48, %v49
    %v52 = vmul.f32 %v51, %v51
    %v54 = vlaneseq
    %v55 = vshrl.u32 %v54, 7
    %v56 = vsub.s32 0, %v55
    %v57 = vrot.slane %v50, %v56
    %v59 = vsub.f32 %v49, %v57
    %v60 = vmul.f32 %v59, %v59
    %v61 = vld [vmem:[#allocation7] sm:$0x1]
    %v62 = vrot.slane %v52, 4
    %v63 = vadd.f32 %v52, %v62
    %v64 = vrot.slane %v63, 2
    %v65 = vadd.f32 %v63, %v64
    %v66 = vrot.slane %v65, 1
    %v67 = vadd.f32 %v65, %v66
    %v68 = vadd.f32 %v61, %v67
    %69 = vst [vmem:[#allocation7] sm:$0x1] %v68
    %v70 = vld [vmem:[#allocation8] sm:$0x1]
    %v71 = vrot.slane %v60, 4
    %v72 = vadd.f32 %v60, %v71
    %v73 = vrot.slane %v72, 2
    %v74 = vadd.f32 %v72, %v73
    %v75 = vrot.slane %v74, 1
    %v76 = vadd.f32 %v74, %v75
    %v77 = vadd.f32 %v70, %v76
    %78 = vst [vmem:[#allocation8] sm:$0x1] %v77
    // Predicated region
    $region26: #{tpu_custom_call.1} parent=1 // pred_check
      _
    $region27: #{tpu_custom_call.1} parent=1 // pred_check_branch
      %80 = sbr.rel (0) target = $region29
    $region28: #{tpu_custom_call.1} parent=1 // pred_region
      %s82 = ssub.s32 16, 16
      %83 = vsyncadd [#allocation4], %s82
      %s85 = sshll.u32 [#allocation7], 4
      %s86 = int_to_ptr.vmem [resolvable:$true] %s85
      %88 = dma.vmem_to_hbm [thread:$0]  %s86, 16, %s3, [#allocation4]
    $region29: #{tpu_custom_call.1} parent=1 // pred_fallthru
      _
    // Predicated region
    $region30: #{tpu_custom_call.1} parent=1 // pred_check
      _
    $region31: #{tpu_custom_call.1} parent=1 // pred_check_branch
      %90 = sbr.rel (0) target = $region33
    $region32: #{tpu_custom_call.1} parent=1 // pred_region
      %s92 = ssub.s32 16, 16
      %93 = vsyncadd [#allocation9], %s92
      %s95 = sshll.u32 [#allocation8], 4
      %s96 = int_to_ptr.vmem [resolvable:$true] %s95
      %98 = dma.vmem_to_hbm [thread:$0]  %s96, 16, %s4, [#allocation9]
    $region33: #{tpu_custom_call.1} parent=1 // pred_fallthru
      _
    // Predicated region
    $region34: #{tpu_custom_call.1} parent=1 // pred_check
      _
    $region35: #{tpu_custom_call.1} parent=1 // pred_check_branch
      %100 = sbr.rel (0) target = $region37
    $region36: #{tpu_custom_call.1} parent=1 // pred_region
      %101 = dma.done [#allocation4], 16
    $region37: #{tpu_custom_call.1} parent=1 // pred_fallthru
      _
    // Predicated region
    $region38: #{tpu_custom_call.1} parent=1 // pred_check
      _
    $region39: #{tpu_custom_call.1} parent=1 // pred_check_branch
      %103 = sbr.rel (0) target = $region41
    $region40: #{tpu_custom_call.1} parent=1 // pred_region
      %104 = dma.done [#allocation9], 16
    $region41: #{tpu_custom_call.1} parent=1 // pred_fallthru
      _
    %105 = vsyncpa [#allocation3], 1
    %106 = vsyncpa [#allocation6], 1
    %107 = vsyncpa [#allocation4], 1
    %108 = vsyncpa [#allocation9], 1

</llo_original>
